<compile_context>
chip_gen: v7x
topology: tpu7x:2x2x1
jax: 0.10.0
libtpu: 0.0.40
codegen_flags: <defaults>
</compile_context>

<pallas_src>
import math

import jax
import jax.numpy as jnp
from jax import lax
from jax.experimental import pallas as pl
from jax.experimental.pallas import tpu as pltpu


_LATERAL_BLOCK_ROWS = 256   # flattened-pixel rows per grid step (multiple of 8)
_CONV_ROW_TARGET = 16       # target image rows per 3x3-conv grid step


# ----------------------------------------------------------------------------
# Pallas kernel bodies
# ----------------------------------------------------------------------------
def _lateral_bias_kernel(x_ref, w_ref, b_ref, o_ref):
    # Top pyramid level: y = x @ w + b  (no top-down addend -> no zeros DMA).
    acc = jnp.dot(x_ref[...], w_ref[...], preferred_element_type=jnp.float32)
    o_ref[...] = (acc + b_ref[...]).astype(o_ref.dtype)


def _lateral_bias_add_kernel(x_ref, w_ref, b_ref, add_ref, o_ref):
    # 1x1 lateral conv fused with bias and the top-down addition.
    acc = jnp.dot(x_ref[...], w_ref[...], preferred_element_type=jnp.float32)
    o_ref[...] = (acc + b_ref[...] + add_ref[...]).astype(o_ref.dtype)


def _make_conv3x3_kernel(th, W, Cin, Cout, blocks_per_image):
    """3x3 'same' conv over a block of `th` image rows; halo rows arrive as two
    separate 1-row refs (zeroed in-kernel at image top/bottom)."""

    def kernel(x_top_ref, x_mid_ref, x_bot_ref, w_ref, b_ref, o_ref):
        i = pl.program_id(0)
        # Zero the halo rows when this block touches the top/bottom image edge.
        keep_top = (jnp.remainder(i, blocks_per_image) != 0).astype(jnp.float32)
        keep_bot = (jnp.remainder(i + 1, blocks_per_image) != 0).astype(jnp.float32)
        top = x_top_ref[...] * keep_top                              # (1, W, Cin)
        bot = x_bot_ref[...] * keep_bot                              # (1, W, Cin)
        xe = jnp.concatenate([top, x_mid_ref[...], bot], axis=0)     # (th+2, W, Cin)

        # Column-shifted copies with zero boundary, lane-concatenated once
        # (im2col along kw) -> 3 matmuls per row with K = 3*Cin instead of
        # 9 slice+reshape taps with K = Cin.
        zcol = jnp.zeros((th + 2, 1, Cin), dtype=xe.dtype)
        xl = jnp.concatenate([zcol, xe[:, :W - 1, :]], axis=1)       # x[.., w-1, .]
        xr = jnp.concatenate([xe[:, 1:, :], zcol], axis=1)           # x[.., w+1, .]
        xcat = jnp.concatenate([xl, xe, xr], axis=2)                 # (th+2, W, 3*Cin)

        w0 = w_ref[0]                                                # (3*Cin, Cout)
        w1 = w_ref[1]
        w2 = w_ref[2]
        bias = b_ref[...]                                            # (1, Cout)

        for r in range(th):  # static unroll; three MXU matmuls per output row
            y = (jnp.dot(xcat[r], w0, preferred_element_type=jnp.float32)
                 + jnp.dot(xcat[r + 1], w1, preferred_element_type=jnp.float32)
                 + jnp.dot(xcat[r + 2], w2, preferred_element_type=jnp.float32)
                 + bias)
            o_ref[r, :, :] = y.astype(o_ref.dtype)

    return kernel


# ----------------------------------------------------------------------------
# Pallas wrappers
# ----------------------------------------------------------------------------
def lateral_conv1x1(x2d, w_io, b_row, add2d=None, *, block_rows=_LATERAL_BLOCK_ROWS):
    """y = x @ w + b (+ add), x flattened to (M, Cin); grid over M, pipelined."""
    M, Cin = x2d.shape
    Cout = w_io.shape[1]
    tm = M if M <= block_rows else block_rows        # full block or multiple of 8
    grid = (pl.cdiv(M, tm),)
    x_spec = pl.BlockSpec((tm, Cin), lambda i: (i, 0))
    w_spec = pl.BlockSpec((Cin, Cout), lambda i: (0, 0))
    b_spec = pl.BlockSpec((1, Cout), lambda i: (0, 0))
    o_spec = pl.BlockSpec((tm, Cout), lambda i: (i, 0))
    cparams = pltpu.CompilerParams(dimension_semantics=("parallel",))
    out_shape = jax.ShapeDtypeStruct((M, Cout), jnp.float32)
    if add2d is None:
        return pl.pallas_call(
            _lateral_bias_kernel, out_shape=out_shape, grid=grid,
            in_specs=[x_spec, w_spec, b_spec], out_specs=o_spec,
            compiler_params=cparams,
        )(x2d, w_io, b_row)
    a_spec = pl.BlockSpec((tm, Cout), lambda i: (i, 0))
    return pl.pallas_call(
        _lateral_bias_add_kernel, out_shape=out_shape, grid=grid,
        in_specs=[x_spec, w_spec, b_spec, a_spec], out_specs=o_spec,
        compiler_params=cparams,
    )(x2d, w_io, b_row, add2d)


def _row_block(H, target=_CONV_ROW_TARGET):
    t = min(H, target)
    while H % t:
        t -= 1
    return t


def conv3x3_same(x_nhwc, w_cat, b_row):
    """3x3 conv, stride 1, padding 1 (NHWC). w_cat: (3, 3*Cin, Cout), b: (1, Cout)."""
    N, H, W, Cin = x_nhwc.shape
    Cout = w_cat.shape[-1]
    th = _row_block(H)                # rows per grid step; divides H exactly
    NH = N * H
    nb = NH // th
    bpi = H // th                     # row blocks per image (for border masking)
    xf = x_nhwc.reshape(NH, W, Cin)   # free reshape in HBM (contiguous)

    kernel = _make_conv3x3_kernel(th, W, Cin, Cout, bpi)
    halo_top = pl.BlockSpec((1, W, Cin),
                            lambda i: (jnp.maximum(i * th - 1, 0), 0, 0))
    mid = pl.BlockSpec((th, W, Cin), lambda i: (i, 0, 0))
    halo_bot = pl.BlockSpec((1, W, Cin),
                            lambda i: (jnp.minimum((i + 1) * th, NH - 1), 0, 0))
    w_spec = pl.BlockSpec((3, 3 * Cin, Cout), lambda i: (0, 0, 0))
    b_spec = pl.BlockSpec((1, Cout), lambda i: (0, 0))
    o_spec = pl.BlockSpec((th, W, Cout), lambda i: (i, 0, 0))

    out = pl.pallas_call(
        kernel,
        out_shape=jax.ShapeDtypeStruct((NH, W, Cout), jnp.float32),
        grid=(nb,),
        in_specs=[halo_top, mid, halo_bot, w_spec, b_spec],
        out_specs=o_spec,
        compiler_params=pltpu.CompilerParams(dimension_semantics=("parallel",)),
    )(xf, xf, xf, w_cat, b_row)
    return out.reshape(N, H, W, Cout)


# ----------------------------------------------------------------------------
# Plain-JAX glue (pure indexing, no FLOPs)
# ----------------------------------------------------------------------------
def _nearest_resize_nhwc(x, size):
    # F.interpolate(mode='nearest', size=size): src = floor(dst * src_size / dst_size)
    N, H, W, C = x.shape
    Hd, Wd = size
    hidx = (jnp.arange(Hd) * H) // Hd
    widx = (jnp.arange(Wd) * W) // Wd
    return x[:, hidx][:, :, widx]


def _nearest_resize_nchw(x, size):
    N, C, H, W = x.shape
    Hd, Wd = size
    hidx = (jnp.arange(Hd) * H) // Hd
    widx = (jnp.arange(Wd) * W) // Wd
    return x[:, :, hidx][:, :, :, widx]


# ----------------------------------------------------------------------------
# Parameter init (mirrors FPN.__init__/init_weights) + one-time layout prep
# ----------------------------------------------------------------------------
def _xavier_uniform(key, shape_oihw):
    cout, cin, kh, kw = shape_oihw
    fan_in = cin * kh * kw
    fan_out = cout * kh * kw
    bound = math.sqrt(6.0 / (fan_in + fan_out))
    return jax.random.uniform(key, shape_oihw, jnp.float32, -bound, bound)


def init_fpn_params(key, in_channels_list, out_channels, num_outs,
                    start_level=0, end_level=-1):
    num_ins = len(in_channels_list)
    backbone_end_level = num_ins if end_level == -1 else end_level
    lat_w, lat_b, fpn_w, fpn_b = [], [], [], []
    for i in range(start_level, backbone_end_level):
        key, k1, k2 = jax.random.split(key, 3)
        lat_w.append(_xavier_uniform(k1, (out_channels, in_channels_list[i], 1, 1)))
        lat_b.append(jnp.zeros((out_channels,), jnp.float32))
        fpn_w.append(_xavier_uniform(k2, (out_channels, out_channels, 3, 3)))
        fpn_b.append(jnp.zeros((out_channels,), jnp.float32))
    # Extra stride-2 convs are created by __init__ but NEVER used by forward()
    # (forward builds extra levels with max_pool2d(1, stride=2)); kept for parity.
    extra_w, extra_b = [], []
    extra_levels = num_outs - backbone_end_level + start_level
    for i in range(max(extra_levels, 0)):
        key, k1 = jax.random.split(key)
        cin = in_channels_list[backbone_end_level - 1] if i == 0 else out_channels
        extra_w.append(_xavier_uniform(k1, (out_channels, cin, 3, 3)))
        extra_b.append(jnp.zeros((out_channels,), jnp.float32))
    return dict(lat_w=lat_w, lat_b=lat_b, fpn_w=fpn_w, fpn_b=fpn_b,
                extra_w=extra_w, extra_b=extra_b,
                start_level=start_level, backbone_end_level=backbone_end_level)


def prepare_fpn_params(params):
    """One-time weight layout prep for the Pallas path (hoisted out of forward)."""
    prep = dict(start_level=params['start_level'],
                backbone_end_level=params['backbone_end_level'])
    lat_w, lat_b, fpn_w, fpn_b = [], [], [], []
    for w, b in zip(params['lat_w'], params['lat_b']):
        lat_w.append(jnp.transpose(w[:, :, 0, 0], (1, 0)))          # (Cin, Cout)
        lat_b.append(b.reshape(1, -1))                              # (1, Cout)
    for w, b in zip(params['fpn_w'], params['fpn_b']):
        cout, cin = w.shape[0], w.shape[1]
        w_hwio = jnp.transpose(w, (2, 3, 1, 0))                     # (3, 3, Cin, Cout)
        fpn_w.append(w_hwio.reshape(3, 3 * cin, cout))              # kw-concat per kh
        fpn_b.append(b.reshape(1, -1))
    prep.update(lat_w=lat_w, lat_b=lat_b, fpn_w=fpn_w, fpn_b=fpn_b)
    return prep


# ----------------------------------------------------------------------------
# FPN forward (Pallas)
# ----------------------------------------------------------------------------
def fpn_forward(inputs_nchw, prepared, num_outs):
    start_level = prepared['start_level']
    L = len(prepared['lat_w'])
    out_channels = prepared['lat_w'][0].shape[1]
    # NCHW -> NHWC (layout glue)
    xs = [jnp.transpose(inputs_nchw[i + start_level], (0, 2, 3, 1)) for i in range(L)]

    # laterals + top-down pathway (bias + add fused into the 1x1 kernel)
    merged = [None] * L
    for i in range(L - 1, -1, -1):
        N, H, W, Cin = xs[i].shape
        x2d = xs[i].reshape(N * H * W, Cin)
        if i == L - 1:
            add2d = None        # top level: no zeros tensor, dedicated kernel
        else:
            # TODO(synk): fuse this nearest-neighbour upsample gather into the
            # lateral kernel (read the coarse level directly) to drop one
            # fine-resolution HBM round trip per level.
            add2d = _nearest_resize_nhwc(merged[i + 1], (H, W)).reshape(
                N * H * W, out_channels)
        m2d = lateral_conv1x1(x2d, prepared['lat_w'][i], prepared['lat_b'][i], add2d)
        merged[i] = m2d.reshape(N, H, W, out_channels)

    # per-level 3x3 fpn convs (gridded row blocks with 1-row halos)
    # TODO(synk): micro levels (e.g. 4x4) could be batched into one call or left
    # to XLA to avoid per-call overhead.
    outs = [conv3x3_same(merged[i], prepared['fpn_w'][i], prepared['fpn_b'][i])
            for i in range(L)]

    # extra levels: max_pool2d(kernel=1, stride=2) == strided subsample (no FLOPs)
    while len(outs) < num_outs:
        outs.append(outs[-1][:, ::2, ::2, :])

    # NHWC -> NCHW
    return tuple(jnp.transpose(o, (0, 3, 1, 2)) for o in outs)


# ----------------------------------------------------------------------------
# Pure-JAX reference (matches the PyTorch forward semantics, NCHW)
# ----------------------------------------------------------------------------
def _ref_conv(x, w, b, padding=0):
    y = lax.conv_general_dilated(
        x, w, window_strides=(1, 1), padding=[(padding, padding)] * 2,
        dimension_numbers=('NCHW', 'OIHW', 'NCHW'),
        precision=lax.Precision.HIGHEST)
    return y + b.reshape(1, -1, 1, 1)


def fpn_reference(inputs_nchw, params, num_outs):
    start_level = params['start_level']
    L = len(params['lat_w'])
    laterals = [_ref_conv(inputs_nchw[i + start_level],
                          params['lat_w'][i], params['lat_b'][i]) for i in range(L)]
    for i in range(L - 1, 0, -1):
        prev_shape = laterals[i - 1].shape[2:]
        laterals[i - 1] = laterals[i - 1] + _nearest_resize_nchw(laterals[i], prev_shape)
    outs = [_ref_conv(laterals[i], params['fpn_w'][i], params['fpn_b'][i], padding=1)
            for i in range(L)]
    while len(outs) < num_outs:
        outs.append(outs[-1][:, :, ::2, ::2])
    return tuple(outs)


# ----------------------------------------------------------------------------
if __name__ == "__main__":
    key = jax.random.PRNGKey(0)
    in_channels_list = [4, 8, 16]
    out_channels = 8
    num_outs = 5

    key, k_par = jax.random.split(key)
    shapes = [(2, 4, 16, 16), (2, 8, 8, 8), (2, 16, 4, 4)]   # NCHW backbone features
    ks = jax.random.split(key, len(shapes))
    inputs = [jax.random.normal(ks[i], shapes[i], jnp.float32) for i in range(len(shapes))]

    params = init_fpn_params(k_par, in_channels_list, out_channels, num_outs)
    prepared = prepare_fpn_params(params)            # one-time layout prep

    outs = fpn_forward(inputs, prepared, num_outs)
    outs = jax.block_until_ready(outs)

    refs = fpn_reference(inputs, params, num_outs)
    expected_shapes = [(2, 8, 16, 16), (2, 8, 8, 8), (2, 8, 4, 4), (2, 8, 2, 2), (2, 8, 1, 1)]
    assert len(outs) == num_outs
    for o, r, es in zip(outs, refs, expected_shapes):
        assert o.shape == tuple(es), (o.shape, es)
        assert o.dtype == jnp.float32
        err = float(jnp.max(jnp.abs(o - r)))
        assert jnp.allclose(o, r, rtol=2e-2, atol=2e-2), err

    print("KERNEL_OK")
</pallas_src>

<mosaic_0001>
module attributes {stable_mosaic.version = 11 : i64} {
  func.func @_lateral_bias_kernel(%arg0: i32, %arg1: memref<32x16xf32, #tpu.memory_space<vmem>>, %arg2: memref<16x8xf32, #tpu.memory_space<vmem>>, %arg3: memref<1x8xf32, #tpu.memory_space<vmem>>, %arg4: memref<32x8xf32, #tpu.memory_space<vmem>>) attributes {dimension_semantics = [#tpu.dimension_semantics<parallel>], iteration_bounds = array<i64: 1>, scalar_prefetch = 0 : i64, scratch_operands = 0 : i64, tpu.core_type = #tpu.core_type<tc>, window_params = [{transform_indices = @transform_0, window_bounds = array<i64: 32, 16>}, {pipeline_mode = #tpu.pipeline_mode<synchronous>, transform_indices = @transform_1, window_bounds = array<i64: 16, 8>}, {pipeline_mode = #tpu.pipeline_mode<synchronous>, transform_indices = @transform_2, window_bounds = array<i64: 1, 8>}, {transform_indices = @transform_3, window_bounds = array<i64: 32, 8>}]} {
    %c0 = arith.constant 0 : index
    %c0_0 = arith.constant 0 : index
    %0 = vector.load %arg1[%c0, %c0_0] : memref<32x16xf32, #tpu.memory_space<vmem>>, vector<32x16xf32>
    %c0_1 = arith.constant 0 : index
    %c0_2 = arith.constant 0 : index
    %1 = vector.load %arg2[%c0_1, %c0_2] : memref<16x8xf32, #tpu.memory_space<vmem>>, vector<16x8xf32>
    %cst = arith.constant dense<0.000000e+00> : vector<32x8xf32>
    %2 = tpu.matmul %0, %1, %cst {dimension_numbers = #tpu.dot_dimension_numbers<[1], [0], [0], [1], [0, 0, 1, 1], [], []>} : vector<32x16xf32>, vector<16x8xf32>, vector<32x8xf32> -> vector<32x8xf32>
    %c0_3 = arith.constant 0 : index
    %c0_4 = arith.constant 0 : index
    %3 = vector.load %arg3[%c0_3, %c0_4] : memref<1x8xf32, #tpu.memory_space<vmem>>, vector<1x8xf32>
    %4 = vector.broadcast %3 : vector<1x8xf32> to vector<32x8xf32>
    %5 = arith.addf %2, %4 : vector<32x8xf32>
    %c0_5 = arith.constant 0 : index
    %c0_6 = arith.constant 0 : index
    %6 = vector.load %arg4[%c0_5, %c0_6] : memref<32x8xf32, #tpu.memory_space<vmem>>, vector<32x8xf32>
    tpu.vector_store %arg4[%c0_5, %c0_6], %5 {strides = array<i32>} : memref<32x8xf32, #tpu.memory_space<vmem>>, vector<32x8xf32>,
    return
  }
  func.func @transform_0(%arg0: i32) -> (i32, i32) {
    %c0_i32 = arith.constant 0 : i32
    %c0_i32_0 = arith.constant 0 : i32
    return %arg0, %c0_i32 : i32, i32
  }
  func.func @transform_1(%arg0: i32) -> (i32, i32) {
    %c0_i32 = arith.constant 0 : i32
    %c0_i32_0 = arith.constant 0 : i32
    %c0_i32_1 = arith.constant 0 : i32
    return %c0_i32, %c0_i32_0 : i32, i32
  }
  func.func @transform_2(%arg0: i32) -> (i32, i32) {
    %c0_i32 = arith.constant 0 : i32
    %c0_i32_0 = arith.constant 0 : i32
    %c0_i32_1 = arith.constant 0 : i32
    return %c0_i32, %c0_i32_0 : i32, i32
  }
  func.func @transform_3(%arg0: i32) -> (i32, i32) {
    %c0_i32 = arith.constant 0 : i32
    %c0_i32_0 = arith.constant 0 : i32
    return %arg0, %c0_i32 : i32, i32
  }
}

</mosaic_0001>

<llo_original>
// kernel: tpu_custom_call.1
$region0: #{tpu_custom_call.1}
  #allocation0 [shape = 'u32[]', space=smem, size = 0x4, offset = 0x4, fixed_abs, tag = 'smem constant byte address 0x4 - core index']
  #allocation1 [shape = 'u32[144,128]{1,0:T(1,128)}', space=vmem, size = 0x12000, scoped, tag = 'internal scratch']
  %s0 = inlined_call_operand.vmem [shape: f32[32,16], index: 0, kind: input, shape index: {}]
  %s1 = inlined_call_operand.vmem [shape: f32[16,8], index: 1, kind: input, shape index: {}]
  %s2 = inlined_call_operand.vmem [shape: f32[1,8], index: 2, kind: input, shape index: {}]
  %s3 = inlined_call_operand.vmem [shape: f32[32,8], index: 3, kind: output, shape index: {}]
  %s4 = sld [smem:[#allocation0]]
  $region22: #{tpu_custom_call.1} parent=0
    _
  %s6 = ssub.s32 1, %s4
  %s7 = scalar_select 0, %s6, %s4
  // Predicated region
  $region2: #{tpu_custom_call.1} parent=0 // pred_check
    _
  $region3: #{tpu_custom_call.1} parent=0 // pred_check_branch
    %9 = sbr.rel (0) target = $region5
  $region4: #{tpu_custom_call.1} parent=0 // pred_region
    _
  $region5: #{tpu_custom_call.1} parent=0 // pred_fallthru
    _
  // Predicated region
  $region6: #{tpu_custom_call.1} parent=0 // pred_check
    _
  $region7: #{tpu_custom_call.1} parent=0 // pred_check_branch
    %11 = sbr.rel (0) target = $region9
  $region8: #{tpu_custom_call.1} parent=0 // pred_region
    _
  $region9: #{tpu_custom_call.1} parent=0 // pred_fallthru
    _
  // Predicated region
  $region10: #{tpu_custom_call.1} parent=0 // pred_check
    _
  $region11: #{tpu_custom_call.1} parent=0 // pred_check_branch
    %13 = sbr.rel (0) target = $region13
  $region12: #{tpu_custom_call.1} parent=0 // pred_region
    _
  $region13: #{tpu_custom_call.1} parent=0 // pred_fallthru
    _
  %v14 = vld [vmem:[%s0] sm:$0xff]
  %v15 = vld [vmem:[%s0 + $0x8] sm:$0xff]
  %v16 = vld [vmem:[%s0 + $0x10] sm:$0xff]
  %v17 = vld [vmem:[%s0 + $0x18] sm:$0xff]
  %v18 = vld [vmem:[%s1] sm:$0xff]
  %v19 = vld [vmem:[%s1 + $0x8] sm:$0xff]
  %v20 = vld [vmem:[%s2] sm:$0x1]
  %v22 = vlaneseq
  %v23 = vshrl.u32 %v22, 7
  %v24 = vsub.s32 0, %v23
  %v25 = vrot.slane %v20, %v24
  %vm27 = vcmask 130048
  %v29 = vsel %vm27, %v14, 0
  %v32 = vsel %vm27, %v15, 0
  %v35 = vsel %vm27, %v16, 0
  %v38 = vsel %vm27, %v17, 0
  %40 = vmatprep.subr.mxu0 0.0
  %41 = vmatpush1.msra.mxu0 %v18
  %42 = vmatprep.subr.mxu0 0.0
  %43 = vmatpush1.msra.mxu0 %v19
  %44 = vmatprep.subr.mxu0 0.0
  %45 = vmatpush1.msra.mxu0 0.0
  %46 = vmatprep.subr.mxu0 0.0
  %47 = vmatpush1.msra.mxu0 0.0
  %48 = vmatprep.subr.mxu0 0.0
  %49 = vmatpush1.msra.mxu0 0.0
  %50 = vmatprep.subr.mxu0 0.0
  %51 = vmatpush1.msra.mxu0 0.0
  %52 = vmatprep.subr.mxu0 0.0
  %53 = vmatpush1.msra.mxu0 0.0
  %54 = vmatprep.subr.mxu0 0.0
  %55 = vmatpush1.msra.mxu0 0.0
  %56 = vmatprep.subr.mxu0 0.0
  %57 = vmatpush1.msra.mxu0 0.0
  %58 = vmatprep.subr.mxu0 0.0
  %59 = vmatpush1.msra.mxu0 0.0
  %60 = vmatprep.subr.mxu0 0.0
  %61 = vmatpush1.msra.mxu0 0.0
  %62 = vmatprep.subr.mxu0 0.0
  %63 = vmatpush1.msra.mxu0 0.0
  %64 = vmatprep.subr.mxu0 0.0
  %65 = vmatpush1.msra.mxu0 0.0
  %66 = vmatprep.subr.mxu0 0.0
  %67 = vmatpush1.msra.mxu0 0.0
  %68 = vmatprep.subr.mxu0 0.0
  %69 = vmatpush1.msra.mxu0 0.0
  %70 = vmatprep.subr.mxu0 0.0
  %71 = vmatpush1.msra.mxu0 0.0
  %72 = vmatprep.subr.mxu0 0.0
  %73 = vmatpush1.msra.mxu0 0.0
  %74 = vmatprep.subr.mxu0 0.0
  %75 = vmatpush1.msra.mxu0 0.0
  %76 = vmatprep.subr.mxu0 0.0
  %77 = vmatpush1.msra.mxu0 0.0
  %78 = vmatprep.subr.mxu0 0.0
  %79 = vmatpush1.msra.mxu0 0.0
  %80 = vmatprep.subr.mxu0 0.0
  %81 = vmatpush1.msra.mxu0 0.0
  %82 = vmatprep.subr.mxu0 0.0
  %83 = vmatpush1.msra.mxu0 0.0
  %84 = vmatprep.subr.mxu0 0.0
  %85 = vmatpush1.msra.mxu0 0.0
  %86 = vmatprep.subr.mxu0 0.0
  %87 = vmatpush1.msra.mxu0 0.0
  %88 = vmatprep.subr.mxu0 0.0
  %89 = vmatpush1.msra.mxu0 0.0
  %90 = vmatprep.subr.mxu0 0.0
  %91 = vmatpush1.msra.mxu0 0.0
  %92 = vmatprep.subr.mxu0 0.0
  %93 = vmatpush1.msra.mxu0 0.0
  %94 = vmatprep.subr.mxu0 0.0
  %95 = vmatpush1.msra.mxu0 0.0
  %96 = vmatprep.subr.mxu0 0.0
  %97 = vmatpush1.msra.mxu0 0.0
  %98 = vmatprep.subr.mxu0 0.0
  %99 = vmatpush1.msra.mxu0 0.0
  %100 = vmatprep.subr.mxu0 0.0
  %101 = vmatpush1.msra.mxu0 0.0
  %102 = vmatprep.subr.mxu0 0.0
  %103 = vmatpush1.msra.mxu0 0.0
  %104 = vmatprep.mubr.f32.mxu0 0.0
  %105 = vmatmul.mubr.f32.gmra.mrb[0].mxu0 %v29
  %v106 = vpop.f32.mrb[0].mxu0
  %v107 = vadd.f32 %v25, %v106
  %v108 = vpop.f32.mrb[0].mxu0
  %109 = vmatprep.mubr.f32.mxu0 0.0
  %110 = vmatmul.mubr.f32.gmra.mrb[0].mxu0 %v32
  %v111 = vpop.f32.mrb[0].mxu0
  %v112 = vadd.f32 %v25, %v111
  %v113 = vpop.f32.mrb[0].mxu0
  %114 = vmatprep.mubr.f32.mxu0 0.0
  %115 = vmatmul.mubr.f32.gmra.mrb[0].mxu0 %v35
  %v116 = vpop.f32.mrb[0].mxu0
  %v117 = vadd.f32 %v25, %v116
  %v118 = vpop.f32.mrb[0].mxu0
  %119 = vmatprep.mubr.f32.mxu0 0.0
  %120 = vmatmul.mubr.f32.gmra.mrb[0].mxu0 %v38
  %v121 = vpop.f32.mrb[0].mxu0
  %v122 = vadd.f32 %v25, %v121
  %v123 = vpop.f32.mrb[0].mxu0
  %124 = vdwg.mxu0
  %vm125 = vcmask 64512
  %126 = vst.msk [vmem:[%s3] sm:$0xff] %vm125, %v107
  %127 = vst.msk [vmem:[%s3 + $0x8] sm:$0xff] %vm125, %v112
  %128 = vst.msk [vmem:[%s3 + $0x10] sm:$0xff] %vm125, %v117
  %129 = vst.msk [vmem:[%s3 + $0x18] sm:$0xff] %vm125, %v122
  // Predicated region
  $region14: #{tpu_custom_call.1} parent=0 // pred_check
    _
  $region15: #{tpu_custom_call.1} parent=0 // pred_check_branch
    %131 = sbr.rel (0) target = $region17
  $region16: #{tpu_custom_call.1} parent=0 // pred_region
    _
  $region17: #{tpu_custom_call.1} parent=0 // pred_fallthru
    _
  // Predicated region
  $region18: #{tpu_custom_call.1} parent=0 // pred_check
    _
  $region19: #{tpu_custom_call.1} parent=0 // pred_check_branch
    %133 = sbr.rel (0) target = $region21
  $region20: #{tpu_custom_call.1} parent=0 // pred_region
    _
  $region21: #{tpu_custom_call.1} parent=0 // pred_fallthru
    _

</llo_original>
